<compile_context>
chip_gen: v7x
topology: tpu7x:2x2x1
jax: 0.10.0
libtpu: 0.0.40
codegen_flags: <defaults>
</compile_context>

<pallas_src>
import functools
import math

import jax
import jax.numpy as jnp
from jax.experimental import pallas as pl
from jax.experimental.pallas import tpu as pltpu


def _round_up(x: int, m: int) -> int:
    return ((x + m - 1) // m) * m


def _sublane_multiple(dtype) -> int:
    # packed-sublane granularity: f32 -> 8, bf16 -> 16, int8 -> 32
    itemsize = jnp.dtype(dtype).itemsize
    return 8 * max(1, 4 // max(1, itemsize))


def _vmem_capacity_bytes() -> int:
    try:
        return int(pltpu.get_tpu_info().vmem_capacity_bytes)
    except Exception:
        return 64 << 20  # conservative (v7x per-TensorCore)


def _check_pipeline_mode() -> bool:
    try:
        pl.BlockSpec((8, 128), lambda i: (0, 0), pipeline_mode=pl.Buffered(1))
        return True
    except Exception:
        return False


_HAS_PIPELINE_MODE = _check_pipeline_mode()


def prepare_mlp_params(weights, biases, compute_dtype=jnp.float32):
    """Cast / reshape params ONCE (call at init, reuse across forward calls).

    weights[i]: (in_i, out_i) -> compute_dtype (bf16 supported, MXU operand dtype)
    biases[i]:  (out_i,)      -> float32, shape (1, out_i)  (added onto the f32 acc)
    """
    dtype = jnp.dtype(compute_dtype)
    params = []
    for w, b in zip(weights, biases):
        params.append(jnp.asarray(w, dtype))
        params.append(jnp.asarray(b, jnp.float32).reshape(1, -1))
    return tuple(params)


def _mlp_kernel(n_layers, negative_slope, *refs):
    # refs = x_ref, (w0, b0, w1, b1, ..., wL, bL), out_ref
    x_ref = refs[0]
    out_ref = refs[-1]
    wb = refs[1:-1]

    # Cast the streamed activations to the param dtype in VMEM (no extra HBM pass).
    h = x_ref[...].astype(wb[0].dtype)
    for i in range(n_layers):
        w = wb[2 * i][...]                    # (d_in, d_out), compute dtype
        b = wb[2 * i + 1][...]                # (1, d_out), f32
        acc = jnp.dot(h, w, preferred_element_type=jnp.float32) + b   # f32 MXU accumulation
        if i < n_layers - 1:
            acc = jnp.where(acc > 0, acc, negative_slope * acc)       # LeakyReLU in f32
            h = acc.astype(w.dtype)           # next MXU pass in param dtype
        else:
            h = acc
    out_ref[...] = h.astype(out_ref.dtype)


def _mlp_xla(x, params, negative_slope, out_dtype):
    """Plain fused XLA dot chain (small-problem bypass / VMEM-overflow fallback)."""
    n_layers = len(params) // 2
    h = x.astype(params[0].dtype)
    for i in range(n_layers):
        h = jnp.dot(h, params[2 * i], preferred_element_type=jnp.float32) + params[2 * i + 1]
        if i < n_layers - 1:
            h = jnp.where(h > 0, h, negative_slope * h).astype(params[0].dtype)
    return h.astype(out_dtype)


def mlp_forward(x, params, negative_slope=0.2, *, batch_tile=2048,
                out_dtype=None, force_pallas=False):
    """x: (B, in_size). params: flat tuple from prepare_mlp_params()."""
    params = tuple(params)
    n_layers = len(params) // 2
    B, in_size = x.shape
    out_size = params[-2].shape[1]
    compute_dtype = jnp.dtype(params[0].dtype)
    out_dtype = jnp.dtype(out_dtype) if out_dtype is not None else jnp.dtype(x.dtype)

    dims = [in_size] + [params[2 * i].shape[1] for i in range(n_layers)]
    max_dim = max(dims)

    # ---- small-problem bypass: launch + DMA overhead dominates tiny batches ----
    if not force_pallas and B * max_dim < (1 << 15):
        return _mlp_xla(x, params, negative_slope, out_dtype)

    # ---- batch tiling (sublane granularity matches the packed compute dtype) ----
    sub = _sublane_multiple(compute_dtype)
    TB = _round_up(min(batch_tile, B), sub)

    # ---- VMEM budget, clamped to the actual chip capacity -----------------------
    cap = _vmem_capacity_bytes()
    budget = cap - (8 << 20)                      # Mosaic internal-scratch headroom
    x_item = jnp.dtype(x.dtype).itemsize
    o_item = out_dtype.itemsize
    c_item = compute_dtype.itemsize
    param_mult = 1 if _HAS_PIPELINE_MODE else 2   # single- vs double-buffered weights
    param_bytes = param_mult * sum(int(math.prod(p.shape)) * p.dtype.itemsize
                                   for p in params)

    def _vmem_need(tb):
        io = 2 * tb * (in_size * x_item + out_size * o_item)   # double-buffered streams
        act = tb * max_dim * (2 * 4 + c_item)                  # f32 temps + cast copy
        return param_bytes + io + act + (2 << 20)

    while _vmem_need(TB) > budget and TB > sub:
        TB = max(sub, _round_up(TB // 2, sub))

    if _vmem_need(TB) > budget:
        # TODO(synk): stream weights over a feature-dim grid axis instead of falling
        # back to XLA when the resident params exceed per-core VMEM (v7x: 64 MiB).
        return _mlp_xla(x, params, negative_slope, out_dtype)

    vmem_limit = int(min(budget, max(_vmem_need(TB), 32 << 20)))
    kernel = functools.partial(_mlp_kernel, n_layers, negative_slope)

    def _pallas_call(single_buffer_weights):
        weight_specs = []
        for p in params:
            if single_buffer_weights and _HAS_PIPELINE_MODE:
                spec = pl.BlockSpec(p.shape, lambda i: (0, 0),
                                    pipeline_mode=pl.Buffered(1))
            else:
                spec = pl.BlockSpec(p.shape, lambda i: (0, 0))
            weight_specs.append(spec)
        return pl.pallas_call(
            kernel,
            out_shape=jax.ShapeDtypeStruct((B, out_size), out_dtype),
            grid=(pl.cdiv(B, TB),),
            in_specs=[pl.BlockSpec((TB, in_size), lambda i: (i, 0))] + weight_specs,
            out_specs=pl.BlockSpec((TB, out_size), lambda i: (i, 0)),
            compiler_params=pltpu.CompilerParams(
                dimension_semantics=("parallel",),   # shard batch axis across TCs
                vmem_limit_bytes=vmem_limit,
            ),
        )(x, *params)

    try:
        return _pallas_call(True)
    except Exception:
        if not _HAS_PIPELINE_MODE:
            raise
        return _pallas_call(False)


def init_mlp_params(key, in_size, hidden_layer_sizes, out_size):
    """Mimics torch.nn.Linear default init (U(-1/sqrt(fan_in), 1/sqrt(fan_in)))."""
    sizes = [in_size] + list(hidden_layer_sizes) + [out_size]
    weights, biases = [], []
    for i in range(1, len(sizes)):
        fan_in, fan_out = sizes[i - 1], sizes[i]
        key, kw, kb = jax.random.split(key, 3)
        bound = 1.0 / math.sqrt(fan_in)
        # stored as (in, out) = transpose of PyTorch's (out, in)
        weights.append(jax.random.uniform(kw, (fan_in, fan_out), jnp.float32, -bound, bound))
        biases.append(jax.random.uniform(kb, (fan_out,), jnp.float32, -bound, bound))
    return weights, biases


def mlp_reference(x, weights, biases, negative_slope=0.2):
    h = x
    for i, (w, b) in enumerate(zip(weights, biases)):
        h = h @ w + b
        if i < len(weights) - 1:
            h = jnp.where(h > 0, h, negative_slope * h)
    return h


if __name__ == "__main__":
    key = jax.random.PRNGKey(0)

    # MLP(in_size=16, out_size=8, hidden_layer_sizes=[32, 32]) -- matches the module.
    in_size, out_size = 16, 8
    hidden_layer_sizes = [32, 32]

    key, kinit = jax.random.split(key)
    weights, biases = init_mlp_params(kinit, in_size, hidden_layer_sizes, out_size)
    params_f32 = prepare_mlp_params(weights, biases, jnp.float32)    # prepared once
    params_bf16 = prepare_mlp_params(weights, biases, jnp.bfloat16)  # prepared once

    # 1) small batch consistent with the module; force the Pallas path once
    key, kx = jax.random.split(key)
    x = jax.random.normal(kx, (8, in_size), jnp.float32)
    y_ref = mlp_reference(x, weights, biases)
    y = jax.block_until_ready(mlp_forward(x, params_f32, force_pallas=True))
    assert y.shape == (8, out_size)
    assert jnp.allclose(y, y_ref, atol=1e-5, rtol=1e-5), "f32 Pallas mismatch vs reference"

    # 2) small-problem bypass (plain XLA path) agrees too
    y_bp = jax.block_until_ready(mlp_forward(x, params_f32))
    assert jnp.allclose(y_bp, y_ref, atol=1e-5, rtol=1e-5), "bypass mismatch vs reference"

    # 3) non-tile-aligned batch: exercises the batch grid + masked boundary block
    key, kx2 = jax.random.split(key)
    x2 = jax.random.normal(kx2, (300, in_size), jnp.float32)
    y2 = jax.block_until_ready(
        mlp_forward(x2, params_f32, batch_tile=128, force_pallas=True))
    assert y2.shape == (300, out_size)
    assert jnp.allclose(y2, mlp_reference(x2, weights, biases), atol=1e-5, rtol=1e-5), \
        "tiled-batch mismatch vs reference"

    # 4) bf16 operands on the MXU with f32 accumulation, bf16 output stream
    key, kx3 = jax.random.split(key)
    x3 = jax.random.normal(kx3, (512, in_size), jnp.float32)
    y3 = jax.block_until_ready(
        mlp_forward(x3, params_bf16, force_pallas=True, out_dtype=jnp.bfloat16))
    assert y3.shape == (512, out_size) and y3.dtype == jnp.bfloat16
    assert jnp.allclose(y3.astype(jnp.float32), mlp_reference(x3, weights, biases),
                        atol=5e-2, rtol=5e-2), "bf16 mismatch vs reference"

    print("KERNEL_OK")
</pallas_src>

<mosaic_0001>
module attributes {stable_mosaic.version = 11 : i64} {
  func.func @_mlp_kernel(%arg0: i32, %arg1: memref<8x16xf32, #tpu.memory_space<vmem>>, %arg2: memref<16x32xf32, #tpu.memory_space<vmem>>, %arg3: memref<1x32xf32, #tpu.memory_space<vmem>>, %arg4: memref<32x32xf32, #tpu.memory_space<vmem>>, %arg5: memref<1x32xf32, #tpu.memory_space<vmem>>, %arg6: memref<32x8xf32, #tpu.memory_space<vmem>>, %arg7: memref<1x8xf32, #tpu.memory_space<vmem>>, %arg8: memref<8x8xf32, #tpu.memory_space<vmem>>) attributes {dimension_semantics = [#tpu.dimension_semantics<parallel>], iteration_bounds = array<i64: 1>, scalar_prefetch = 0 : i64, scratch_operands = 0 : i64, tpu.core_type = #tpu.core_type<tc>, window_params = [{transform_indices = @transform_0, window_bounds = array<i64: 8, 16>}, {pipeline_mode = #tpu.pipeline_mode<synchronous>, transform_indices = @transform_1, window_bounds = array<i64: 16, 32>}, {pipeline_mode = #tpu.pipeline_mode<synchronous>, transform_indices = @transform_2, window_bounds = array<i64: 1, 32>}, {pipeline_mode = #tpu.pipeline_mode<synchronous>, transform_indices = @transform_3, window_bounds = array<i64: 32, 32>}, {pipeline_mode = #tpu.pipeline_mode<synchronous>, transform_indices = @transform_4, window_bounds = array<i64: 1, 32>}, {pipeline_mode = #tpu.pipeline_mode<synchronous>, transform_indices = @transform_5, window_bounds = array<i64: 32, 8>}, {pipeline_mode = #tpu.pipeline_mode<synchronous>, transform_indices = @transform_6, window_bounds = array<i64: 1, 8>}, {transform_indices = @transform_7, window_bounds = array<i64: 8, 8>}]} {
    %c0 = arith.constant 0 : index
    %c0_0 = arith.constant 0 : index
    %0 = vector.load %arg1[%c0, %c0_0] : memref<8x16xf32, #tpu.memory_space<vmem>>, vector<8x16xf32>
    %c0_1 = arith.constant 0 : index
    %c0_2 = arith.constant 0 : index
    %1 = vector.load %arg2[%c0_1, %c0_2] : memref<16x32xf32, #tpu.memory_space<vmem>>, vector<16x32xf32>
    %c0_3 = arith.constant 0 : index
    %c0_4 = arith.constant 0 : index
    %2 = vector.load %arg3[%c0_3, %c0_4] : memref<1x32xf32, #tpu.memory_space<vmem>>, vector<1x32xf32>
    %cst = arith.constant dense<0.000000e+00> : vector<8x32xf32>
    %3 = tpu.matmul %0, %1, %cst {dimension_numbers = #tpu.dot_dimension_numbers<[1], [0], [0], [1], [0, 0, 1, 1], [], []>} : vector<8x16xf32>, vector<16x32xf32>, vector<8x32xf32> -> vector<8x32xf32>
    %4 = vector.broadcast %2 : vector<1x32xf32> to vector<8x32xf32>
    %5 = arith.addf %3, %4 : vector<8x32xf32>
    %cst_5 = arith.constant 0.000000e+00 : f32
    %6 = vector.broadcast %cst_5 : f32 to vector<8x32xf32>
    %7 = arith.cmpf ogt, %5, %6 : vector<8x32xf32>
    %cst_6 = arith.constant 2.000000e-01 : f32
    %8 = vector.broadcast %cst_6 : f32 to vector<8x32xf32>
    %9 = arith.mulf %8, %5 : vector<8x32xf32>
    %10 = arith.select %7, %5, %9 : vector<8x32xi1>, vector<8x32xf32>
    %c0_7 = arith.constant 0 : index
    %c0_8 = arith.constant 0 : index
    %11 = vector.load %arg4[%c0_7, %c0_8] : memref<32x32xf32, #tpu.memory_space<vmem>>, vector<32x32xf32>
    %c0_9 = arith.constant 0 : index
    %c0_10 = arith.constant 0 : index
    %12 = vector.load %arg5[%c0_9, %c0_10] : memref<1x32xf32, #tpu.memory_space<vmem>>, vector<1x32xf32>
    %cst_11 = arith.constant dense<0.000000e+00> : vector<8x32xf32>
    %13 = tpu.matmul %10, %11, %cst_11 {dimension_numbers = #tpu.dot_dimension_numbers<[1], [0], [0], [1], [0, 0, 1, 1], [], []>} : vector<8x32xf32>, vector<32x32xf32>, vector<8x32xf32> -> vector<8x32xf32>
    %14 = vector.broadcast %12 : vector<1x32xf32> to vector<8x32xf32>
    %15 = arith.addf %13, %14 : vector<8x32xf32>
    %cst_12 = arith.constant 0.000000e+00 : f32
    %16 = vector.broadcast %cst_12 : f32 to vector<8x32xf32>
    %17 = arith.cmpf ogt, %15, %16 : vector<8x32xf32>
    %cst_13 = arith.constant 2.000000e-01 : f32
    %18 = vector.broadcast %cst_13 : f32 to vector<8x32xf32>
    %19 = arith.mulf %18, %15 : vector<8x32xf32>
    %20 = arith.select %17, %15, %19 : vector<8x32xi1>, vector<8x32xf32>
    %c0_14 = arith.constant 0 : index
    %c0_15 = arith.constant 0 : index
    %21 = vector.load %arg6[%c0_14, %c0_15] : memref<32x8xf32, #tpu.memory_space<vmem>>, vector<32x8xf32>
    %c0_16 = arith.constant 0 : index
    %c0_17 = arith.constant 0 : index
    %22 = vector.load %arg7[%c0_16, %c0_17] : memref<1x8xf32, #tpu.memory_space<vmem>>, vector<1x8xf32>
    %cst_18 = arith.constant dense<0.000000e+00> : vector<8x8xf32>
    %23 = tpu.matmul %20, %21, %cst_18 {dimension_numbers = #tpu.dot_dimension_numbers<[1], [0], [0], [1], [0, 0, 1, 1], [], []>} : vector<8x32xf32>, vector<32x8xf32>, vector<8x8xf32> -> vector<8x8xf32>
    %24 = vector.broadcast %22 : vector<1x8xf32> to vector<8x8xf32>
    %25 = arith.addf %23, %24 : vector<8x8xf32>
    %c0_19 = arith.constant 0 : index
    %c0_20 = arith.constant 0 : index
    %26 = vector.load %arg8[%c0_19, %c0_20] : memref<8x8xf32, #tpu.memory_space<vmem>>, vector<8x8xf32>
    tpu.vector_store %arg8[%c0_19, %c0_20], %25 {strides = array<i32>} : memref<8x8xf32, #tpu.memory_space<vmem>>, vector<8x8xf32>,
    return
  }
  func.func @transform_0(%arg0: i32) -> (i32, i32) {
    %c0_i32 = arith.constant 0 : i32
    %c0_i32_0 = arith.constant 0 : i32
    return %arg0, %c0_i32 : i32, i32
  }
  func.func @transform_1(%arg0: i32) -> (i32, i32) {
    %c0_i32 = arith.constant 0 : i32
    %c0_i32_0 = arith.constant 0 : i32
    %c0_i32_1 = arith.constant 0 : i32
    return %c0_i32, %c0_i32_0 : i32, i32
  }
  func.func @transform_2(%arg0: i32) -> (i32, i32) {
    %c0_i32 = arith.constant 0 : i32
    %c0_i32_0 = arith.constant 0 : i32
    %c0_i32_1 = arith.constant 0 : i32
    return %c0_i32, %c0_i32_0 : i32, i32
  }
  func.func @transform_3(%arg0: i32) -> (i32, i32) {
    %c0_i32 = arith.constant 0 : i32
    %c0_i32_0 = arith.constant 0 : i32
    %c0_i32_1 = arith.constant 0 : i32
    return %c0_i32, %c0_i32_0 : i32, i32
  }
  func.func @transform_4(%arg0: i32) -> (i32, i32) {
    %c0_i32 = arith.constant 0 : i32
    %c0_i32_0 = arith.constant 0 : i32
    %c0_i32_1 = arith.constant 0 : i32
    return %c0_i32, %c0_i32_0 : i32, i32
  }
  func.func @transform_5(%arg0: i32) -> (i32, i32) {
    %c0_i32 = arith.constant 0 : i32
    %c0_i32_0 = arith.constant 0 : i32
    %c0_i32_1 = arith.constant 0 : i32
    return %c0_i32, %c0_i32_0 : i32, i32
  }
  func.func @transform_6(%arg0: i32) -> (i32, i32) {
    %c0_i32 = arith.constant 0 : i32
    %c0_i32_0 = arith.constant 0 : i32
    %c0_i32_1 = arith.constant 0 : i32
    return %c0_i32, %c0_i32_0 : i32, i32
  }
  func.func @transform_7(%arg0: i32) -> (i32, i32) {
    %c0_i32 = arith.constant 0 : i32
    %c0_i32_0 = arith.constant 0 : i32
    return %arg0, %c0_i32 : i32, i32
  }
}

module attributes {stable_mosaic.version = 11 : i64} {
  func.func @_mlp_kernel(%arg0: i32, %arg1: memref<8x16xf32, #tpu.memory_space<vmem>>, %arg2: memref<16x32xf32, #tpu.memory_space<vmem>>, %arg3: memref<1x32xf32, #tpu.memory_space<vmem>>, %arg4: memref<32x32xf32, #tpu.memory_space<vmem>>, %arg5: memref<1x32xf32, #tpu.memory_space<vmem>>, %arg6: memref<32x8xf32, #tpu.memory_space<vmem>>, %arg7: memref<1x8xf32, #tpu.memory_space<vmem>>, %arg8: memref<8x8xf32, #tpu.memory_space<vmem>>) attributes {dimension_semantics = [#tpu.dimension_semantics<parallel>], iteration_bounds = array<i64: 1>, scalar_prefetch = 0 : i64, scratch_operands = 0 : i64, tpu.core_type = #tpu.core_type<tc>, window_params = [{transform_indices = @transform_0, window_bounds = array<i64: 8, 16>}, {pipeline_mode = #tpu.pipeline_mode<synchronous>, transform_indices = @transform_1, window_bounds = array<i64: 16, 32>}, {pipeline_mode = #tpu.pipeline_mode<synchronous>, transform_indices = @transform_2, window_bounds = array<i64: 1, 32>}, {pipeline_mode = #tpu.pipeline_mode<synchronous>, transform_indices = @transform_3, window_bounds = array<i64: 32, 32>}, {pipeline_mode = #tpu.pipeline_mode<synchronous>, transform_indices = @transform_4, window_bounds = array<i64: 1, 32>}, {pipeline_mode = #tpu.pipeline_mode<synchronous>, transform_indices = @transform_5, window_bounds = array<i64: 32, 8>}, {pipeline_mode = #tpu.pipeline_mode<synchronous>, transform_indices = @transform_6, window_bounds = array<i64: 1, 8>}, {transform_indices = @transform_7, window_bounds = array<i64: 8, 8>}]} {
    %c0 = arith.constant 0 : index
    %c0_0 = arith.constant 0 : index
    %0 = vector.load %arg1[%c0, %c0_0] : memref<8x16xf32, #tpu.memory_space<vmem>>, vector<8x16xf32>
    %c0_1 = arith.constant 0 : index
    %c0_2 = arith.constant 0 : index
    %1 = vector.load %arg2[%c0_1, %c0_2] : memref<16x32xf32, #tpu.memory_space<vmem>>, vector<16x32xf32>
    %c0_3 = arith.constant 0 : index
    %c0_4 = arith.constant 0 : index
    %2 = vector.load %arg3[%c0_3, %c0_4] : memref<1x32xf32, #tpu.memory_space<vmem>>, vector<1x32xf32>
    %cst = arith.constant dense<0.000000e+00> : vector<8x32xf32>
    %3 = tpu.matmul %0, %1, %cst {dimension_numbers = #tpu.dot_dimension_numbers<[1], [0], [0], [1], [0, 0, 1, 1], [], []>} : vector<8x16xf32>, vector<16x32xf32>, vector<8x32xf32> -> vector<8x32xf32>
    %4 = vector.broadcast %2 : vector<1x32xf32> to vector<8x32xf32>
    %5 = arith.addf %3, %4 : vector<8x32xf32>
    %cst_5 = arith.constant 0.000000e+00 : f32
    %6 = vector.broadcast %cst_5 : f32 to vector<8x32xf32>
    %7 = arith.cmpf ogt, %5, %6 : vector<8x32xf32>
    %cst_6 = arith.constant 2.000000e-01 : f32
    %8 = vector.broadcast %cst_6 : f32 to vector<8x32xf32>
    %9 = arith.mulf %8, %5 : vector<8x32xf32>
    %10 = arith.select %7, %5, %9 : vector<8x32xi1>, vector<8x32xf32>
    %c0_7 = arith.constant 0 : index
    %c0_8 = arith.constant 0 : index
    %11 = vector.load %arg4[%c0_7, %c0_8] : memref<32x32xf32, #tpu.memory_space<vmem>>, vector<32x32xf32>
    %c0_9 = arith.constant 0 : index
    %c0_10 = arith.constant 0 : index
    %12 = vector.load %arg5[%c0_9, %c0_10] : memref<1x32xf32, #tpu.memory_space<vmem>>, vector<1x32xf32>
    %cst_11 = arith.constant dense<0.000000e+00> : vector<8x32xf32>
    %13 = tpu.matmul %10, %11, %cst_11 {dimension_numbers = #tpu.dot_dimension_numbers<[1], [0], [0], [1], [0, 0, 1, 1], [], []>} : vector<8x32xf32>, vector<32x32xf32>, vector<8x32xf32> -> vector<8x32xf32>
    %14 = vector.broadcast %12 : vector<1x32xf32> to vector<8x32xf32>
    %15 = arith.addf %13, %14 : vector<8x32xf32>
    %cst_12 = arith.constant 0.000000e+00 : f32
    %16 = vector.broadcast %cst_12 : f32 to vector<8x32xf32>
    %17 = arith.cmpf ogt, %15, %16 : vector<8x32xf32>
    %cst_13 = arith.constant 2.000000e-01 : f32
    %18 = vector.broadcast %cst_13 : f32 to vector<8x32xf32>
    %19 = arith.mulf %18, %15 : vector<8x32xf32>
    %20 = arith.select %17, %15, %19 : vector<8x32xi1>, vector<8x32xf32>
    %c0_14 = arith.constant 0 : index
    %c0_15 = arith.constant 0 : index
    %21 = vector.load %arg6[%c0_14, %c0_15] : memref<32x8xf32, #tpu.memory_space<vmem>>, vector<32x8xf32>
    %c0_16 = arith.constant 0 : index
    %c0_17 = arith.constant 0 : index
    %22 = vector.load %arg7[%c0_16, %c0_17] : memref<1x8xf32, #tpu.memory_space<vmem>>, vector<1x8xf32>
    %cst_18 = arith.constant dense<0.000000e+00> : vector<8x8xf32>
    %23 = tpu.matmul %20, %21, %cst_18 {dimension_numbers = #tpu.dot_dimension_numbers<[1], [0], [0], [1], [0, 0, 1, 1], [], []>} : vector<8x32xf32>, vector<32x8xf32>, vector<8x8xf32> -> vector<8x8xf32>
    %24 = vector.broadcast %22 : vector<1x8xf32> to vector<8x8xf32>
    %25 = arith.addf %23, %24 : vector<8x8xf32>
    %c0_19 = arith.constant 0 : index
    %c0_20 = arith.constant 0 : index
    %26 = vector.load %arg8[%c0_19, %c0_20] : memref<8x8xf32, #tpu.memory_space<vmem>>, vector<8x8xf32>
    tpu.vector_store %arg8[%c0_19, %c0_20], %25 {strides = array<i32>} : memref<8x8xf32, #tpu.memory_space<vmem>>, vector<8x8xf32>,
    return
  }
  func.func @transform_0(%arg0: i32) -> (i32, i32) {
    %c0_i32 = arith.constant 0 : i32
    %c0_i32_0 = arith.constant 0 : i32
    return %arg0, %c0_i32 : i32, i32
  }
  func.func @transform_1(%arg0: i32) -> (i32, i32) {
    %c0_i32 = arith.constant 0 : i32
    %c0_i32_0 = arith.constant 0 : i32
    %c0_i32_1 = arith.constant 0 : i32
    return %c0_i32, %c0_i32_0 : i32, i32
  }
  func.func @transform_2(%arg0: i32) -> (i32, i32) {
    %c0_i32 = arith.constant 0 : i32
    %c0_i32_0 = arith.constant 0 : i32
    %c0_i32_1 = arith.constant 0 : i32
    return %c0_i32, %c0_i32_0 : i32, i32
  }
  func.func @transform_3(%arg0: i32) -> (i32, i32) {
    %c0_i32 = arith.constant 0 : i32
    %c0_i32_0 = arith.constant 0 : i32
    %c0_i32_1 = arith.constant 0 : i32
    return %c0_i32, %c0_i32_0 : i32, i32
  }
  func.func @transform_4(%arg0: i32) -> (i32, i32) {
    %c0_i32 = arith.constant 0 : i32
    %c0_i32_0 = arith.constant 0 : i32
    %c0_i32_1 = arith.constant 0 : i32
    return %c0_i32, %c0_i32_0 : i32, i32
  }
  func.func @transform_5(%arg0: i32) -> (i32, i32) {
    %c0_i32 = arith.constant 0 : i32
    %c0_i32_0 = arith.constant 0 : i32
    %c0_i32_1 = arith.constant 0 : i32
    return %c0_i32, %c0_i32_0 : i32, i32
  }
  func.func @transform_6(%arg0: i32) -> (i32, i32) {
    %c0_i32 = arith.constant 0 : i32
    %c0_i32_0 = arith.constant 0 : i32
    %c0_i32_1 = arith.constant 0 : i32
    return %c0_i32, %c0_i32_0 : i32, i32
  }
  func.func @transform_7(%arg0: i32) -> (i32, i32) {
    %c0_i32 = arith.constant 0 : i32
    %c0_i32_0 = arith.constant 0 : i32
    return %arg0, %c0_i32 : i32, i32
  }
}

</mosaic_0001>

<llo_original>
// kernel: tpu_custom_call.1
$region0: #{tpu_custom_call.1}
  #allocation0 [shape = 'u32[]', space=smem, size = 0x4, offset = 0x4, fixed_abs, tag = 'smem constant byte address 0x4 - core index']
  #allocation1 [shape = 'u32[144,128]{1,0:T(1,128)}', space=vmem, size = 0x12000, scoped, tag = 'internal scratch']
  %s0 = inlined_call_operand.hbm [shape: f32[8,16], index: 0, kind: input, shape index: {}]
  %s1 = inlined_call_operand.vmem [shape: f32[16,32], index: 1, kind: input, shape index: {}]
  %s2 = inlined_call_operand.vmem [shape: f32[1,32], index: 2, kind: input, shape index: {}]
  %s3 = inlined_call_operand.vmem [shape: f32[32,32], index: 3, kind: input, shape index: {}]
  %s4 = inlined_call_operand.vmem [shape: f32[1,32], index: 4, kind: input, shape index: {}]
  %s5 = inlined_call_operand.vmem [shape: f32[32,8], index: 5, kind: input, shape index: {}]
  %s6 = inlined_call_operand.vmem [shape: f32[1,8], index: 6, kind: input, shape index: {}]
  %s7 = inlined_call_operand.hbm [shape: f32[8,8], index: 7, kind: output, shape index: {}]
  %s8 = sld [smem:[#allocation0]]
  $region42: #{tpu_custom_call.1} parent=0
    _
  %s10 = ssub.s32 1, %s8
  %s11 = scalar_select 0, %s10, %s8
  $region1: #{tpu_custom_call.1} parent=0
    #allocation2 [shape = 'u8[4096]{0}', space=vmem, size = 0x1000, scoped, tag = 'input window, operand 0, single buffered']
    #allocation3 [shape = 's32[1]{0}', space=sflag, size = 0x4, scoped, tag = 'scoped memory for tpu_custom_call.1']
    #allocation4 [shape = 's32[1]{0}', space=sflag, size = 0x4, scoped, tag = 'scoped memory for tpu_custom_call.1']
    #allocation5 [shape = 'u8[4096]{0}', space=vmem, size = 0x1000, scoped, tag = 'output window, operand 0, single buffered']
    %12 = vsyncpa [#allocation3], 0
    %13 = vsyncpa [#allocation4], 0
    // Predicated region
    $region2: #{tpu_custom_call.1} parent=1 // pred_check
      _
    $region3: #{tpu_custom_call.1} parent=1 // pred_check_branch
      %15 = sbr.rel (0) target = $region5
    $region4: #{tpu_custom_call.1} parent=1 // pred_region
      %s17 = ssub.s32 128, 128
      %18 = vsyncadd [#allocation3], %s17
      %s20 = sshll.u32 [#allocation2], 4
      %s21 = int_to_ptr.vmem [resolvable:$true] %s20
      %23 = dma.hbm_to_vmem [thread:$0]  %s0, 128, %s21, [#allocation3]
    $region5: #{tpu_custom_call.1} parent=1 // pred_fallthru
      _
    // Predicated region
    $region6: #{tpu_custom_call.1} parent=1 // pred_check
      _
    $region7: #{tpu_custom_call.1} parent=1 // pred_check_branch
      %25 = sbr.rel (0) target = $region9
    $region8: #{tpu_custom_call.1} parent=1 // pred_region
      _
    $region9: #{tpu_custom_call.1} parent=1 // pred_fallthru
      _
    // Predicated region
    $region10: #{tpu_custom_call.1} parent=1 // pred_check
      _
    $region11: #{tpu_custom_call.1} parent=1 // pred_check_branch
      %27 = sbr.rel (0) target = $region13
    $region12: #{tpu_custom_call.1} parent=1 // pred_region
      _
    $region13: #{tpu_custom_call.1} parent=1 // pred_fallthru
      _
    // Predicated region
    $region14: #{tpu_custom_call.1} parent=1 // pred_check
      _
    $region15: #{tpu_custom_call.1} parent=1 // pred_check_branch
      %29 = sbr.rel (0) target = $region17
    $region16: #{tpu_custom_call.1} parent=1 // pred_region
      _
    $region17: #{tpu_custom_call.1} parent=1 // pred_fallthru
      _
    // Predicated region
    $region18: #{tpu_custom_call.1} parent=1 // pred_check
      _
    $region19: #{tpu_custom_call.1} parent=1 // pred_check_branch
      %31 = sbr.rel (0) target = $region21
    $region20: #{tpu_custom_call.1} parent=1 // pred_region
      _
    $region21: #{tpu_custom_call.1} parent=1 // pred_fallthru
      _
    // Predicated region
    $region22: #{tpu_custom_call.1} parent=1 // pred_check
      _
    $region23: #{tpu_custom_call.1} parent=1 // pred_check_branch
      %33 = sbr.rel (0) target = $region25
    $region24: #{tpu_custom_call.1} parent=1 // pred_region
      _
    $region25: #{tpu_custom_call.1} parent=1 // pred_fallthru
      _
    // Predicated region
    $region26: #{tpu_custom_call.1} parent=1 // pred_check
      _
    $region27: #{tpu_custom_call.1} parent=1 // pred_check_branch
      %35 = sbr.rel (0) target = $region29
    $region28: #{tpu_custom_call.1} parent=1 // pred_region
      _
    $region29: #{tpu_custom_call.1} parent=1 // pred_fallthru
      _
    // Predicated region
    $region30: #{tpu_custom_call.1} parent=1 // pred_check
      _
    $region31: #{tpu_custom_call.1} parent=1 // pred_check_branch
      %37 = sbr.rel (0) target = $region33
    $region32: #{tpu_custom_call.1} parent=1 // pred_region
      %38 = dma.done [#allocation3], 128
    $region33: #{tpu_custom_call.1} parent=1 // pred_fallthru
      _
    %v39 = vld [vmem:[#allocation2] sm:$0xff]
    %v40 = vld [vmem:[%s1] sm:$0xff]
    %v41 = vld [vmem:[%s1 + $0x8] sm:$0xff]
    %v42 = vld [vmem:[%s2] sm:$0x1]
    %v44 = vlaneseq
    %v45 = vshrl.u32 %v44, 7
    %v46 = vsub.s32 0, %v45
    %v47 = vrot.slane %v42, %v46
    %vm49 = vcmask 130048
    %v51 = vsel %vm49, %v39, 0
    %53 = vmatprep.subr.mxu0 0.0
    %54 = vmatpush1.msra.mxu0 %v40
    %55 = vmatprep.subr.mxu0 0.0
    %56 = vmatpush1.msra.mxu0 %v41
    %57 = vmatprep.subr.mxu0 0.0
    %58 = vmatpush1.msra.mxu0 0.0
    %59 = vmatprep.subr.mxu0 0.0
    %60 = vmatpush1.msra.mxu0 0.0
    %61 = vmatprep.subr.mxu0 0.0
    %62 = vmatpush1.msra.mxu0 0.0
    %63 = vmatprep.subr.mxu0 0.0
    %64 = vmatpush1.msra.mxu0 0.0
    %65 = vmatprep.subr.mxu0 0.0
    %66 = vmatpush1.msra.mxu0 0.0
    %67 = vmatprep.subr.mxu0 0.0
    %68 = vmatpush1.msra.mxu0 0.0
    %69 = vmatprep.subr.mxu0 0.0
    %70 = vmatpush1.msra.mxu0 0.0
    %71 = vmatprep.subr.mxu0 0.0
    %72 = vmatpush1.msra.mxu0 0.0
    %73 = vmatprep.subr.mxu0 0.0
    %74 = vmatpush1.msra.mxu0 0.0
    %75 = vmatprep.subr.mxu0 0.0
    %76 = vmatpush1.msra.mxu0 0.0
    %77 = vmatprep.subr.mxu0 0.0
    %78 = vmatpush1.msra.mxu0 0.0
    %79 = vmatprep.subr.mxu0 0.0
    %80 = vmatpush1.msra.mxu0 0.0
    %81 = vmatprep.subr.mxu0 0.0
    %82 = vmatpush1.msra.mxu0 0.0
    %83 = vmatprep.subr.mxu0 0.0
    %84 = vmatpush1.msra.mxu0 0.0
    %85 = vmatprep.subr.mxu0 0.0
    %86 = vmatpush1.msra.mxu0 0.0
    %87 = vmatprep.subr.mxu0 0.0
    %88 = vmatpush1.msra.mxu0 0.0
    %89 = vmatprep.subr.mxu0 0.0
    %90 = vmatpush1.msra.mxu0 0.0
    %91 = vmatprep.subr.mxu0 0.0
    %92 = vmatpush1.msra.mxu0 0.0
    %93 = vmatprep.subr.mxu0 0.0
    %94 = vmatpush1.msra.mxu0 0.0
    %95 = vmatprep.subr.mxu0 0.0
    %96 = vmatpush1.msra.mxu0 0.0
    %97 = vmatprep.subr.mxu0 0.0
    %98 = vmatpush1.msra.mxu0 0.0
    %99 = vmatprep.subr.mxu0 0.0
    %100 = vmatpush1.msra.mxu0 0.0
    %101 = vmatprep.subr.mxu0 0.0
    %102 = vmatpush1.msra.mxu0 0.0
    %103 = vmatprep.subr.mxu0 0.0
    %104 = vmatpush1.msra.mxu0 0.0
    %105 = vmatprep.subr.mxu0 0.0
    %106 = vmatpush1.msra.mxu0 0.0
    %107 = vmatprep.subr.mxu0 0.0
    %108 = vmatpush1.msra.mxu0 0.0
    %109 = vmatprep.subr.mxu0 0.0
    %110 = vmatpush1.msra.mxu0 0.0
    %111 = vmatprep.subr.mxu0 0.0
    %112 = vmatpush1.msra.mxu0 0.0
    %113 = vmatprep.subr.mxu0 0.0
    %114 = vmatpush1.msra.mxu0 0.0
    %115 = vmatprep.subr.mxu0 0.0
    %116 = vmatpush1.msra.mxu0 0.0
    %117 = vmatprep.mubr.f32.mxu0 0.0
    %118 = vmatmul.mubr.f32.gmra.mrb[0].mxu0 %v51
    %v119 = vpop.f32.mrb[0].mxu0
    %v120 = vadd.f32 %v47, %v119
    %v121 = vpop.f32.mrb[0].mxu0
    %122 = vdwg.mxu0
    %vm123 = vcmp.gt.f32.partialorder %v120, 0.0
    %v124 = vmul.f32 %v120, 0.2
    %v125 = vsel %vm123, %v120, %v124
    %v126 = vld [vmem:[%s3] sm:$0xff]
    %v127 = vld [vmem:[%s3 + $0x8] sm:$0xff]
    %v128 = vld [vmem:[%s3 + $0x10] sm:$0xff]
    %v129 = vld [vmem:[%s3 + $0x18] sm:$0xff]
    %v130 = vld [vmem:[%s4] sm:$0x1]
    %v132 = vlaneseq
    %v133 = vshrl.u32 %v132, 7
    %v134 = vsub.s32 0, %v133
    %v135 = vrot.slane %v130, %v134
    %vm137 = vcmask 261120
    %v139 = vsel %vm137, %v125, 0
    %141 = vmatprep.subr.mxu0 0.0
    %142 = vmatpush1.msra.mxu0 %v126
    %143 = vmatprep.subr.mxu0 0.0
    %144 = vmatpush1.msra.mxu0 %v127
    %145 = vmatprep.subr.mxu0 0.0
    %146 = vmatpush1.msra.mxu0 %v128
    %147 = vmatprep.subr.mxu0 0.0
    %148 = vmatpush1.msra.mxu0 %v129
    %149 = vmatprep.subr.mxu0 0.0
    %150 = vmatpush1.msra.mxu0 0.0
    %151 = vmatprep.subr.mxu0 0.0
    %152 = vmatpush1.msra.mxu0 0.0
    %153 = vmatprep.subr.mxu0 0.0
    %154 = vmatpush1.msra.mxu0 0.0
    %155 = vmatprep.subr.mxu0 0.0
    %156 = vmatpush1.msra.mxu0 0.0
    %157 = vmatprep.subr.mxu0 0.0
    %158 = vmatpush1.msra.mxu0 0.0
    %159 = vmatprep.subr.mxu0 0.0
    %160 = vmatpush1.msra.mxu0 0.0
    %161 = vmatprep.subr.mxu0 0.0
    %162 = vmatpush1.msra.mxu0 0.0
    %163 = vmatprep.subr.mxu0 0.0
    %164 = vmatpush1.msra.mxu0 0.0
    %165 = vmatprep.subr.mxu0 0.0
    %166 = vmatpush1.msra.mxu0 0.0
    %167 = vmatprep.subr.mxu0 0.0
    %168 = vmatpush1.msra.mxu0 0.0
    %169 = vmatprep.subr.mxu0 0.0
    %170 = vmatpush1.msra.mxu0 0.0
    %171 = vmatprep.subr.mxu0 0.0
    %172 = vmatpush1.msra.mxu0 0.0
    %173 = vmatprep.subr.mxu0 0.0
    %174 = vmatpush1.msra.mxu0 0.0
    %175 = vmatprep.subr.mxu0 0.0
    %176 = vmatpush1.msra.mxu0 0.0
    %177 = vmatprep.subr.mxu0 0.0
    %178 = vmatpush1.msra.mxu0 0.0
    %179 = vmatprep.subr.mxu0 0.0
    %180 = vmatpush1.msra.mxu0 0.0
    %181 = vmatprep.subr.mxu0 0.0
    %182 = vmatpush1.msra.mxu0 0.0
    %183 = vmatprep.subr.mxu0 0.0
    %184 = vmatpush1.msra.mxu0 0.0
    %185 = vmatprep.subr.mxu0 0.0
    %186 = vmatpush1.msra.mxu0 0.0
    %187 = vmatprep.subr.mxu0 0.0
    %188 = vmatpush1.msra.mxu0 0.0
    %189 = vmatprep.subr.mxu0 0.0
    %190 = vmatpush1.msra.mxu0 0.0
    %191 = vmatprep.subr.mxu0 0.0
    %192 = vmatpush1.msra.mxu0 0.0
    %193 = vmatprep.subr.mxu0 0.0
    %194 = vmatpush1.msra.mxu0 0.0
    %195 = vmatprep.subr.mxu0 0.0
    %196 = vmatpush1.msra.mxu0 0.0
    %197 = vmatprep.subr.mxu0 0.0
    %198 = vmatpush1.msra.mxu0 0.0
    %199 = vmatprep.subr.mxu0 0.0
    %200 = vmatpush1.msra.mxu0 0.0
    %201 = vmatprep.subr.mxu0 0.0
    %202 = vmatpush1.msra.mxu0 0.0
    %203 = vmatprep.subr.mxu0 0.0
    %204 = vmatpush1.msra.mxu0 0.0
    %205 = vmatprep.mubr.f32.mxu0 0.0
    %206 = vmatmul.mubr.f32.gmra.mrb[0].mxu0 %v139
    %v207 = vpop.f32.mrb[0].mxu0
    %v208 = vadd.f32 %v135, %v207
    %v209 = vpop.f32.mrb[0].mxu0
    %210 = vdwg.mxu0
    %vm211 = vcmp.gt.f32.partialorder %v208, 0.0
    %v212 = vmul.f32 %v208, 0.2
    %v213 = vsel %vm211, %v208, %v212
    %v214 = vld [vmem:[%s5] sm:$0xff]
    %v215 = vld [vmem:[%s5 + $0x8] sm:$0xff]
    %v216 = vld [vmem:[%s5 + $0x10] sm:$0xff]
    %v217 = vld [vmem:[%s5 + $0x18] sm:$0xff]
    %v218 = vld [vmem:[%s6] sm:$0x1]
    %v220 = vlaneseq
    %v221 = vshrl.u32 %v220, 7
    %v222 = vsub.s32 0, %v221
    %v223 = vrot.slane %v218, %v222
    %v226 = vsel %vm137, %v213, 0
    %228 = vmatprep.subr.mxu0 0.0
    %229 = vmatpush1.msra.mxu0 %v214
    %230 = vmatprep.subr.mxu0 0.0
    %231 = vmatpush1.msra.mxu0 %v215
    %232 = vmatprep.subr.mxu0 0.0
    %233 = vmatpush1.msra.mxu0 %v216
    %234 = vmatprep.subr.mxu0 0.0
    %235 = vmatpush1.msra.mxu0 %v217
    %236 = vmatprep.subr.mxu0 0.0
    %237 = vmatpush1.msra.mxu0 0.0
    %238 = vmatprep.subr.mxu0 0.0
    %239 = vmatpush1.msra.mxu0 0.0
    %240 = vmatprep.subr.mxu0 0.0
    %241 = vmatpush1.msra.mxu0 0.0
    %242 = vmatprep.subr.mxu0 0.0
    %243 = vmatpush1.msra.mxu0 0.0
    %244 = vmatprep.subr.mxu0 0.0
    %245 = vmatpush1.msra.mxu0 0.0
    %246 = vmatprep.subr.mxu0 0.0
    %247 = vmatpush1.msra.mxu0 0.0
    %248 = vmatprep.subr.mxu0 0.0
    %249 = vmatpush1.msra.mxu0 0.0
    %250 = vmatprep.subr.mxu0 0.0
    %251 = vmatpush1.msra.mxu0 0.0
    %252 = vmatprep.subr.mxu0 0.0
    %253 = vmatpush1.msra.mxu0 0.0
    %254 = vmatprep.subr.mxu0 0.0
    %255 = vmatpush1.msra.mxu0 0.0
    %256 = vmatprep.subr.mxu0 0.0
    %257 = vmatpush1.msra.mxu0 0.0
    %258 = vmatprep.subr.mxu0 0.0
    %259 = vmatpush1.msra.mxu0 0.0
    %260 = vmatprep.subr.mxu0 0.0
    %261 = vmatpush1.msra.mxu0 0.0
    %262 = vmatprep.subr.mxu0 0.0
    %263 = vmatpush1.msra.mxu0 0.0
    %264 = vmatprep.subr.mxu0 0.0
    %265 = vmatpush1.msra.mxu0 0.0
    %266 = vmatprep.subr.mxu0 0.0
    %267 = vmatpush1.msra.mxu0 0.0
    %268 = vmatprep.subr.mxu0 0.0
    %269 = vmatpush1.msra.mxu0 0.0
    %270 = vmatprep.subr.mxu0 0.0
    %271 = vmatpush1.msra.mxu0 0.0
    %272 = vmatprep.subr.mxu0 0.0
    %273 = vmatpush1.msra.mxu0 0.0
    %274 = vmatprep.subr.mxu0 0.0
    %275 = vmatpush1.msra.mxu0 0.0
    %276 = vmatprep.subr.mxu0 0.0
    %277 = vmatpush1.msra.mxu0 0.0
    %278 = vmatprep.subr.mxu0 0.0
    %279 = vmatpush1.msra.mxu0 0.0
    %280 = vmatprep.subr.mxu0 0.0
    %281 = vmatpush1.msra.mxu0 0.0
    %282 = vmatprep.subr.mxu0 0.0
    %283 = vmatpush1.msra.mxu0 0.0
    %284 = vmatprep.subr.mxu0 0.0
    %285 = vmatpush1.msra.mxu0 0.0
    %286 = vmatprep.subr.mxu0 0.0
    %287 = vmatpush1.msra.mxu0 0.0
    %288 = vmatprep.subr.mxu0 0.0
    %289 = vmatpush1.msra.mxu0 0.0
    %290 = vmatprep.subr.mxu0 0.0
    %291 = vmatpush1.msra.mxu0 0.0
    %292 = vmatprep.mubr.f32.mxu0 0.0
    %293 = vmatmul.mubr.f32.gmra.mrb[0].mxu0 %v226
    %v294 = vpop.f32.mrb[0].mxu0
    %v295 = vadd.f32 %v223, %v294
    %v296 = vpop.f32.mrb[0].mxu0
    %297 = vdwg.mxu0
    %vm298 = vcmask 64512
    %299 = vst.msk [vmem:[#allocation5] sm:$0xff] %vm298, %v295
    // Predicated region
    $region34: #{tpu_custom_call.1} parent=1 // pred_check
      _
    $region35: #{tpu_custom_call.1} parent=1 // pred_check_branch
      %301 = sbr.rel (0) target = $region37
    $region36: #{tpu_custom_call.1} parent=1 // pred_region
      %s303 = ssub.s32 128, 128
      %304 = vsyncadd [#allocation4], %s303
      %s306 = sshll.u32 [#allocation5], 4
      %s307 = int_to_ptr.vmem [resolvable:$true] %s306
      %309 = dma.vmem_to_hbm [thread:$0]  %s307, 128, %s7, [#allocation4]
    $region37: #{tpu_custom_call.1} parent=1 // pred_fallthru
      _
    // Predicated region
    $region38: #{tpu_custom_call.1} parent=1 // pred_check
      _
    $region39: #{tpu_custom_call.1} parent=1 // pred_check_branch
      %311 = sbr.rel (0) target = $region41
    $region40: #{tpu_custom_call.1} parent=1 // pred_region
      %312 = dma.done [#allocation4], 128
    $region41: #{tpu_custom_call.1} parent=1 // pred_fallthru
      _
    %313 = vsyncpa [#allocation3], 1
    %314 = vsyncpa [#allocation4], 1

// kernel: tpu_custom_call.1
$region0: #{tpu_custom_call.1}
  #allocation0 [shape = 'u32[]', space=smem, size = 0x4, offset = 0x4, fixed_abs, tag = 'smem constant byte address 0x4 - core index']
  #allocation1 [shape = 'u32[144,128]{1,0:T(1,128)}', space=vmem, size = 0x12000, scoped, tag = 'internal scratch']
  %s0 = inlined_call_operand.hbm [shape: f32[8,16], index: 0, kind: input, shape index: {}]
  %s1 = inlined_call_operand.vmem [shape: f32[16,32], index: 1, kind: input, shape index: {}]
  %s2 = inlined_call_operand.vmem [shape: f32[1,32], index: 2, kind: input, shape index: {}]
  %s3 = inlined_call_operand.vmem [shape: f32[32,32], index: 3, kind: input, shape index: {}]
  %s4 = inlined_call_operand.vmem [shape: f32[1,32], index: 4, kind: input, shape index: {}]
  %s5 = inlined_call_operand.vmem [shape: f32[32,8], index: 5, kind: input, shape index: {}]
  %s6 = inlined_call_operand.vmem [shape: f32[1,8], index: 6, kind: input, shape index: {}]
  %s7 = inlined_call_operand.hbm [shape: f32[8,8], index: 7, kind: output, shape index: {}]
  %s8 = sld [smem:[#allocation0]]
  $region42: #{tpu_custom_call.1} parent=0
    _
  %s10 = ssub.s32 1, %s8
  %s11 = scalar_select 0, %s10, %s8
  $region1: #{tpu_custom_call.1} parent=0
    #allocation2 [shape = 'u8[4096]{0}', space=vmem, size = 0x1000, scoped, tag = 'input window, operand 0, single buffered']
    #allocation3 [shape = 's32[1]{0}', space=sflag, size = 0x4, scoped, tag = 'scoped memory for tpu_custom_call.1']
    #allocation4 [shape = 's32[1]{0}', space=sflag, size = 0x4, scoped, tag = 'scoped memory for tpu_custom_call.1']
    #allocation5 [shape = 'u8[4096]{0}', space=vmem, size = 0x1000, scoped, tag = 'output window, operand 0, single buffered']
    %12 = vsyncpa [#allocation3], 0
    %13 = vsyncpa [#allocation4], 0
    // Predicated region
    $region2: #{tpu_custom_call.1} parent=1 // pred_check
      _
    $region3: #{tpu_custom_call.1} parent=1 // pred_check_branch
      %15 = sbr.rel (0) target = $region5
    $region4: #{tpu_custom_call.1} parent=1 // pred_region
      %s17 = ssub.s32 128, 128
      %18 = vsyncadd [#allocation3], %s17
      %s20 = sshll.u32 [#allocation2], 4
      %s21 = int_to_ptr.vmem [resolvable:$true] %s20
      %23 = dma.hbm_to_vmem [thread:$0]  %s0, 128, %s21, [#allocation3]
    $region5: #{tpu_custom_call.1} parent=1 // pred_fallthru
      _
    // Predicated region
    $region6: #{tpu_custom_call.1} parent=1 // pred_check
      _
    $region7: #{tpu_custom_call.1} parent=1 // pred_check_branch
      %25 = sbr.rel (0) target = $region9
    $region8: #{tpu_custom_call.1} parent=1 // pred_region
      _
    $region9: #{tpu_custom_call.1} parent=1 // pred_fallthru
      _
    // Predicated region
    $region10: #{tpu_custom_call.1} parent=1 // pred_check
      _
    $region11: #{tpu_custom_call.1} parent=1 // pred_check_branch
      %27 = sbr.rel (0) target = $region13
    $region12: #{tpu_custom_call.1} parent=1 // pred_region
      _
    $region13: #{tpu_custom_call.1} parent=1 // pred_fallthru
      _
    // Predicated region
    $region14: #{tpu_custom_call.1} parent=1 // pred_check
      _
    $region15: #{tpu_custom_call.1} parent=1 // pred_check_branch
      %29 = sbr.rel (0) target = $region17
    $region16: #{tpu_custom_call.1} parent=1 // pred_region
      _
    $region17: #{tpu_custom_call.1} parent=1 // pred_fallthru
      _
    // Predicated region
    $region18: #{tpu_custom_call.1} parent=1 // pred_check
      _
    $region19: #{tpu_custom_call.1} parent=1 // pred_check_branch
      %31 = sbr.rel (0) target = $region21
    $region20: #{tpu_custom_call.1} parent=1 // pred_region
      _
    $region21: #{tpu_custom_call.1} parent=1 // pred_fallthru
      _
    // Predicated region
    $region22: #{tpu_custom_call.1} parent=1 // pred_check
      _
    $region23: #{tpu_custom_call.1} parent=1 // pred_check_branch
      %33 = sbr.rel (0) target = $region25
    $region24: #{tpu_custom_call.1} parent=1 // pred_region
      _
    $region25: #{tpu_custom_call.1} parent=1 // pred_fallthru
      _
    // Predicated region
    $region26: #{tpu_custom_call.1} parent=1 // pred_check
      _
    $region27: #{tpu_custom_call.1} parent=1 // pred_check_branch
      %35 = sbr.rel (0) target = $region29
    $region28: #{tpu_custom_call.1} parent=1 // pred_region
      _
    $region29: #{tpu_custom_call.1} parent=1 // pred_fallthru
      _
    // Predicated region
    $region30: #{tpu_custom_call.1} parent=1 // pred_check
      _
    $region31: #{tpu_custom_call.1} parent=1 // pred_check_branch
      %37 = sbr.rel (0) target = $region33
    $region32: #{tpu_custom_call.1} parent=1 // pred_region
      %38 = dma.done [#allocation3], 128
    $region33: #{tpu_custom_call.1} parent=1 // pred_fallthru
      _
    %v39 = vld [vmem:[#allocation2] sm:$0xff]
    %v40 = vld [vmem:[%s1] sm:$0xff]
    %v41 = vld [vmem:[%s1 + $0x8] sm:$0xff]
    %v42 = vld [vmem:[%s2] sm:$0x1]
    %v44 = vlaneseq
    %v45 = vshrl.u32 %v44, 7
    %v46 = vsub.s32 0, %v45
    %v47 = vrot.slane %v42, %v46
    %vm49 = vcmask 130048
    %v51 = vsel %vm49, %v39, 0
    %53 = vmatprep.subr.mxu0 0.0
    %54 = vmatpush1.msra.mxu0 %v40
    %55 = vmatprep.subr.mxu0 0.0
    %56 = vmatpush1.msra.mxu0 %v41
    %57 = vmatprep.subr.mxu0 0.0
    %58 = vmatpush1.msra.mxu0 0.0
    %59 = vmatprep.subr.mxu0 0.0
    %60 = vmatpush1.msra.mxu0 0.0
    %61 = vmatprep.subr.mxu0 0.0
    %62 = vmatpush1.msra.mxu0 0.0
    %63 = vmatprep.subr.mxu0 0.0
    %64 = vmatpush1.msra.mxu0 0.0
    %65 = vmatprep.subr.mxu0 0.0
    %66 = vmatpush1.msra.mxu0 0.0
    %67 = vmatprep.subr.mxu0 0.0
    %68 = vmatpush1.msra.mxu0 0.0
    %69 = vmatprep.subr.mxu0 0.0
    %70 = vmatpush1.msra.mxu0 0.0
    %71 = vmatprep.subr.mxu0 0.0
    %72 = vmatpush1.msra.mxu0 0.0
    %73 = vmatprep.subr.mxu0 0.0
    %74 = vmatpush1.msra.mxu0 0.0
    %75 = vmatprep.subr.mxu0 0.0
    %76 = vmatpush1.msra.mxu0 0.0
    %77 = vmatprep.subr.mxu0 0.0
    %78 = vmatpush1.msra.mxu0 0.0
    %79 = vmatprep.subr.mxu0 0.0
    %80 = vmatpush1.msra.mxu0 0.0
    %81 = vmatprep.subr.mxu0 0.0
    %82 = vmatpush1.msra.mxu0 0.0
    %83 = vmatprep.subr.mxu0 0.0
    %84 = vmatpush1.msra.mxu0 0.0
    %85 = vmatprep.subr.mxu0 0.0
    %86 = vmatpush1.msra.mxu0 0.0
    %87 = vmatprep.subr.mxu0 0.0
    %88 = vmatpush1.msra.mxu0 0.0
    %89 = vmatprep.subr.mxu0 0.0
    %90 = vmatpush1.msra.mxu0 0.0
    %91 = vmatprep.subr.mxu0 0.0
    %92 = vmatpush1.msra.mxu0 0.0
    %93 = vmatprep.subr.mxu0 0.0
    %94 = vmatpush1.msra.mxu0 0.0
    %95 = vmatprep.subr.mxu0 0.0
    %96 = vmatpush1.msra.mxu0 0.0
    %97 = vmatprep.subr.mxu0 0.0
    %98 = vmatpush1.msra.mxu0 0.0
    %99 = vmatprep.subr.mxu0 0.0
    %100 = vmatpush1.msra.mxu0 0.0
    %101 = vmatprep.subr.mxu0 0.0
    %102 = vmatpush1.msra.mxu0 0.0
    %103 = vmatprep.subr.mxu0 0.0
    %104 = vmatpush1.msra.mxu0 0.0
    %105 = vmatprep.subr.mxu0 0.0
    %106 = vmatpush1.msra.mxu0 0.0
    %107 = vmatprep.subr.mxu0 0.0
    %108 = vmatpush1.msra.mxu0 0.0
    %109 = vmatprep.subr.mxu0 0.0
    %110 = vmatpush1.msra.mxu0 0.0
    %111 = vmatprep.subr.mxu0 0.0
    %112 = vmatpush1.msra.mxu0 0.0
    %113 = vmatprep.subr.mxu0 0.0
    %114 = vmatpush1.msra.mxu0 0.0
    %115 = vmatprep.subr.mxu0 0.0
    %116 = vmatpush1.msra.mxu0 0.0
    %117 = vmatprep.mubr.f32.mxu0 0.0
    %118 = vmatmul.mubr.f32.gmra.mrb[0].mxu0 %v51
    %v119 = vpop.f32.mrb[0].mxu0
    %v120 = vadd.f32 %v47, %v119
    %v121 = vpop.f32.mrb[0].mxu0
    %122 = vdwg.mxu0
    %vm123 = vcmp.gt.f32.partialorder %v120, 0.0
    %v124 = vmul.f32 %v120, 0.2
    %v125 = vsel %vm123, %v120, %v124
    %v126 = vld [vmem:[%s3] sm:$0xff]
    %v127 = vld [vmem:[%s3 + $0x8] sm:$0xff]
    %v128 = vld [vmem:[%s3 + $0x10] sm:$0xff]
    %v129 = vld [vmem:[%s3 + $0x18] sm:$0xff]
    %v130 = vld [vmem:[%s4] sm:$0x1]
    %v132 = vlaneseq
    %v133 = vshrl.u32 %v132, 7
    %v134 = vsub.s32 0, %v133
    %v135 = vrot.slane %v130, %v134
    %vm137 = vcmask 261120
    %v139 = vsel %vm137, %v125, 0
    %141 = vmatprep.subr.mxu0 0.0
    %142 = vmatpush1.msra.mxu0 %v126
    %143 = vmatprep.subr.mxu0 0.0
    %144 = vmatpush1.msra.mxu0 %v127
    %145 = vmatprep.subr.mxu0 0.0
    %146 = vmatpush1.msra.mxu0 %v128
    %147 = vmatprep.subr.mxu0 0.0
    %148 = vmatpush1.msra.mxu0 %v129
    %149 = vmatprep.subr.mxu0 0.0
    %150 = vmatpush1.msra.mxu0 0.0
    %151 = vmatprep.subr.mxu0 0.0
    %152 = vmatpush1.msra.mxu0 0.0
    %153 = vmatprep.subr.mxu0 0.0
    %154 = vmatpush1.msra.mxu0 0.0
    %155 = vmatprep.subr.mxu0 0.0
    %156 = vmatpush1.msra.mxu0 0.0
    %157 = vmatprep.subr.mxu0 0.0
    %158 = vmatpush1.msra.mxu0 0.0
    %159 = vmatprep.subr.mxu0 0.0
    %160 = vmatpush1.msra.mxu0 0.0
    %161 = vmatprep.subr.mxu0 0.0
    %162 = vmatpush1.msra.mxu0 0.0
    %163 = vmatprep.subr.mxu0 0.0
    %164 = vmatpush1.msra.mxu0 0.0
    %165 = vmatprep.subr.mxu0 0.0
    %166 = vmatpush1.msra.mxu0 0.0
    %167 = vmatprep.subr.mxu0 0.0
    %168 = vmatpush1.msra.mxu0 0.0
    %169 = vmatprep.subr.mxu0 0.0
    %170 = vmatpush1.msra.mxu0 0.0
    %171 = vmatprep.subr.mxu0 0.0
    %172 = vmatpush1.msra.mxu0 0.0
    %173 = vmatprep.subr.mxu0 0.0
    %174 = vmatpush1.msra.mxu0 0.0
    %175 = vmatprep.subr.mxu0 0.0
    %176 = vmatpush1.msra.mxu0 0.0
    %177 = vmatprep.subr.mxu0 0.0
    %178 = vmatpush1.msra.mxu0 0.0
    %179 = vmatprep.subr.mxu0 0.0
    %180 = vmatpush1.msra.mxu0 0.0
    %181 = vmatprep.subr.mxu0 0.0
    %182 = vmatpush1.msra.mxu0 0.0
    %183 = vmatprep.subr.mxu0 0.0
    %184 = vmatpush1.msra.mxu0 0.0
    %185 = vmatprep.subr.mxu0 0.0
    %186 = vmatpush1.msra.mxu0 0.0
    %187 = vmatprep.subr.mxu0 0.0
    %188 = vmatpush1.msra.mxu0 0.0
    %189 = vmatprep.subr.mxu0 0.0
    %190 = vmatpush1.msra.mxu0 0.0
    %191 = vmatprep.subr.mxu0 0.0
    %192 = vmatpush1.msra.mxu0 0.0
    %193 = vmatprep.subr.mxu0 0.0
    %194 = vmatpush1.msra.mxu0 0.0
    %195 = vmatprep.subr.mxu0 0.0
    %196 = vmatpush1.msra.mxu0 0.0
    %197 = vmatprep.subr.mxu0 0.0
    %198 = vmatpush1.msra.mxu0 0.0
    %199 = vmatprep.subr.mxu0 0.0
    %200 = vmatpush1.msra.mxu0 0.0
    %201 = vmatprep.subr.mxu0 0.0
    %202 = vmatpush1.msra.mxu0 0.0
    %203 = vmatprep.subr.mxu0 0.0
    %204 = vmatpush1.msra.mxu0 0.0
    %205 = vmatprep.mubr.f32.mxu0 0.0
    %206 = vmatmul.mubr.f32.gmra.mrb[0].mxu0 %v139
    %v207 = vpop.f32.mrb[0].mxu0
    %v208 = vadd.f32 %v135, %v207
    %v209 = vpop.f32.mrb[0].mxu0
    %210 = vdwg.mxu0
    %vm211 = vcmp.gt.f32.partialorder %v208, 0.0
    %v212 = vmul.f32 %v208, 0.2
    %v213 = vsel %vm211, %v208, %v212
    %v214 = vld [vmem:[%s5] sm:$0xff]
    %v215 = vld [vmem:[%s5 + $0x8] sm:$0xff]
    %v216 = vld [vmem:[%s5 + $0x10] sm:$0xff]
    %v217 = vld [vmem:[%s5 + $0x18] sm:$0xff]
    %v218 = vld [vmem:[%s6] sm:$0x1]
    %v220 = vlaneseq
    %v221 = vshrl.u32 %v220, 7
    %v222 = vsub.s32 0, %v221
    %v223 = vrot.slane %v218, %v222
    %v226 = vsel %vm137, %v213, 0
    %228 = vmatprep.subr.mxu0 0.0
    %229 = vmatpush1.msra.mxu0 %v214
    %230 = vmatprep.subr.mxu0 0.0
    %231 = vmatpush1.msra.mxu0 %v215
    %232 = vmatprep.subr.mxu0 0.0
    %233 = vmatpush1.msra.mxu0 %v216
    %234 = vmatprep.subr.mxu0 0.0
    %235 = vmatpush1.msra.mxu0 %v217
    %236 = vmatprep.subr.mxu0 0.0
    %237 = vmatpush1.msra.mxu0 0.0
    %238 = vmatprep.subr.mxu0 0.0
    %239 = vmatpush1.msra.mxu0 0.0
    %240 = vmatprep.subr.mxu0 0.0
    %241 = vmatpush1.msra.mxu0 0.0
    %242 = vmatprep.subr.mxu0 0.0
    %243 = vmatpush1.msra.mxu0 0.0
    %244 = vmatprep.subr.mxu0 0.0
    %245 = vmatpush1.msra.mxu0 0.0
    %246 = vmatprep.subr.mxu0 0.0
    %247 = vmatpush1.msra.mxu0 0.0
    %248 = vmatprep.subr.mxu0 0.0
    %249 = vmatpush1.msra.mxu0 0.0
    %250 = vmatprep.subr.mxu0 0.0
    %251 = vmatpush1.msra.mxu0 0.0
    %252 = vmatprep.subr.mxu0 0.0
    %253 = vmatpush1.msra.mxu0 0.0
    %254 = vmatprep.subr.mxu0 0.0
    %255 = vmatpush1.msra.mxu0 0.0
    %256 = vmatprep.subr.mxu0 0.0
    %257 = vmatpush1.msra.mxu0 0.0
    %258 = vmatprep.subr.mxu0 0.0
    %259 = vmatpush1.msra.mxu0 0.0
    %260 = vmatprep.subr.mxu0 0.0
    %261 = vmatpush1.msra.mxu0 0.0
    %262 = vmatprep.subr.mxu0 0.0
    %263 = vmatpush1.msra.mxu0 0.0
    %264 = vmatprep.subr.mxu0 0.0
    %265 = vmatpush1.msra.mxu0 0.0
    %266 = vmatprep.subr.mxu0 0.0
    %267 = vmatpush1.msra.mxu0 0.0
    %268 = vmatprep.subr.mxu0 0.0
    %269 = vmatpush1.msra.mxu0 0.0
    %270 = vmatprep.subr.mxu0 0.0
    %271 = vmatpush1.msra.mxu0 0.0
    %272 = vmatprep.subr.mxu0 0.0
    %273 = vmatpush1.msra.mxu0 0.0
    %274 = vmatprep.subr.mxu0 0.0
    %275 = vmatpush1.msra.mxu0 0.0
    %276 = vmatprep.subr.mxu0 0.0
    %277 = vmatpush1.msra.mxu0 0.0
    %278 = vmatprep.subr.mxu0 0.0
    %279 = vmatpush1.msra.mxu0 0.0
    %280 = vmatprep.subr.mxu0 0.0
    %281 = vmatpush1.msra.mxu0 0.0
    %282 = vmatprep.subr.mxu0 0.0
    %283 = vmatpush1.msra.mxu0 0.0
    %284 = vmatprep.subr.mxu0 0.0
    %285 = vmatpush1.msra.mxu0 0.0
    %286 = vmatprep.subr.mxu0 0.0
    %287 = vmatpush1.msra.mxu0 0.0
    %288 = vmatprep.subr.mxu0 0.0
    %289 = vmatpush1.msra.mxu0 0.0
    %290 = vmatprep.subr.mxu0 0.0
    %291 = vmatpush1.msra.mxu0 0.0
    %292 = vmatprep.mubr.f32.mxu0 0.0
    %293 = vmatmul.mubr.f32.gmra.mrb[0].mxu0 %v226
    %v294 = vpop.f32.mrb[0].mxu0
    %v295 = vadd.f32 %v223, %v294
    %v296 = vpop.f32.mrb[0].mxu0
    %297 = vdwg.mxu0
    %vm298 = vcmask 64512
    %299 = vst.msk [vmem:[#allocation5] sm:$0xff] %vm298, %v295
    // Predicated region
    $region34: #{tpu_custom_call.1} parent=1 // pred_check
      _
    $region35: #{tpu_custom_call.1} parent=1 // pred_check_branch
      %301 = sbr.rel (0) target = $region37
    $region36: #{tpu_custom_call.1} parent=1 // pred_region
      %s303 = ssub.s32 128, 128
      %304 = vsyncadd [#allocation4], %s303
      %s306 = sshll.u32 [#allocation5], 4
      %s307 = int_to_ptr.vmem [resolvable:$true] %s306
      %309 = dma.vmem_to_hbm [thread:$0]  %s307, 128, %s7, [#allocation4]
    $region37: #{tpu_custom_call.1} parent=1 // pred_fallthru
      _
    // Predicated region
    $region38: #{tpu_custom_call.1} parent=1 // pred_check
      _
    $region39: #{tpu_custom_call.1} parent=1 // pred_check_branch
      %311 = sbr.rel (0) target = $region41
    $region40: #{tpu_custom_call.1} parent=1 // pred_region
      %312 = dma.done [#allocation4], 128
    $region41: #{tpu_custom_call.1} parent=1 // pred_fallthru
      _
    %313 = vsyncpa [#allocation3], 1
    %314 = vsyncpa [#allocation4], 1

</llo_original>
